<compile_context>
chip_gen: v7x
topology: tpu7x:2x2x1
jax: 0.10.0
libtpu: 0.0.40
codegen_flags: <defaults>
</compile_context>

<pallas_src>
import jax
import jax.numpy as jnp
from jax.experimental import pallas as pl
from jax.experimental.pallas import tpu as pltpu


def _conv1x1_kernel(x_ref, w_ref, b_ref, o_ref):
    # x_ref: (C_in, TN) spatial-lane tile
    # w_ref: (C_out, C_in) resident weight
    # b_ref: (C_out, 1)    resident bias (broadcast over lanes)
    x = x_ref[...]
    w = w_ref[...]
    c_in = x.shape[0]

    if c_in <= 8:
        # Tiny-K path: a (C_out x c_in) matmul fills <1% of the MXU and pays
        # push/pop latency per tile; do the channel combine on the VPU with
        # c_in broadcast multiply-accumulates instead (co-issues under DMA).
        acc = w[:, 0:1].astype(jnp.float32) * x[0:1, :].astype(jnp.float32)
        for c in range(1, c_in):
            acc = acc + w[:, c : c + 1].astype(jnp.float32) * x[
                c : c + 1, :
            ].astype(jnp.float32)
    else:
        acc = jnp.dot(w, x, preferred_element_type=jnp.float32)

    o_ref[...] = (acc + b_ref[...].astype(jnp.float32)).astype(o_ref.dtype)


def _round_up(x, m):
    return ((x + m - 1) // m) * m


def _round_down(x, m):
    return (x // m) * m


def _pick_spatial_tile(hw, c_in, c_out, x_itemsize, out_itemsize, batch):
    """Largest 128-multiple lane tile fitting a v7x-safe VMEM budget."""
    # Double-buffered x tile + out tile, per lane column.
    per_lane = 2 * (x_itemsize * c_in + out_itemsize * c_out)
    budget = 24 * 1024 * 1024  # under the 32 MiB scoped limit on every gen
    tn = budget // max(per_lane, 1)
    tn = min(tn, 8192)                       # lane-tile cap
    tn = max(128, _round_down(tn, 128))
    tn = min(tn, _round_up(hw, 128))         # never exceed the spatial extent
    # v7x has 2 TensorCores: keep >=2 grid steps so "parallel" axes can split.
    if batch * pl.cdiv(hw, tn) < 2 and hw > 128:
        tn = max(128, _round_up(pl.cdiv(hw, 2), 128))
    return tn


def detect_forward(x_nchw, weight, bias, *, use_bf16_inputs=False):
    """Forward pass of Detect (1x1 conv, NCHW).

    x_nchw : (B, C_in, H, W)     float32
    weight : (C_out, C_in, 1, 1) float32  (PyTorch Conv2d layout)
    bias   : (C_out,)            float32
    returns: (B, C_out, H, W)    float32
    """
    B, C_in, H, W = x_nchw.shape
    C_out = weight.shape[0]
    HW = H * W

    out_dtype = x_nchw.dtype

    # NCHW -> (B, C_in, H*W): pure reshape, spatial already trailing (lanes).
    x3 = x_nchw.reshape(B, C_in, HW)
    w2 = weight.reshape(C_out, C_in)
    b2 = bias.reshape(C_out, 1).astype(jnp.float32)

    if use_bf16_inputs:
        # Deliberate numerics change (~1e-2 rel err) that halves the dominant
        # HBM stream; accumulation stays f32 in-kernel.  Off by default.
        x3 = x3.astype(jnp.bfloat16)
        w2 = w2.astype(jnp.bfloat16)

    x_itemsize = jnp.dtype(x3.dtype).itemsize
    out_itemsize = jnp.dtype(out_dtype).itemsize

    tn = _pick_spatial_tile(HW, C_in, C_out, x_itemsize, out_itemsize, B)
    grid = (B, pl.cdiv(HW, tn))  # cdiv grid: partial last block is masked

    cost = pl.CostEstimate(
        flops=2 * B * HW * C_in * C_out,
        transcendentals=0,
        bytes_accessed=(
            x_itemsize * B * C_in * HW
            + out_itemsize * B * C_out * HW
            + x_itemsize * C_out * C_in
            + 4 * C_out
        ),
    )

    out = pl.pallas_call(
        _conv1x1_kernel,
        out_shape=jax.ShapeDtypeStruct((B, C_out, HW), out_dtype),
        grid=grid,
        in_specs=[
            # x: one (C_in, tn) spatial column-tile per grid step (pipelined,
            # double-buffered by the BlockSpec machinery).
            pl.BlockSpec((None, C_in, tn), lambda b, j: (b, 0, j)),
            # weight / bias: whole-array blocks, grid-invariant index_map.
            pl.BlockSpec((C_out, C_in), lambda b, j: (0, 0)),
            pl.BlockSpec((C_out, 1), lambda b, j: (0, 0)),
        ],
        out_specs=pl.BlockSpec((None, C_out, tn), lambda b, j: (b, 0, j)),
        compiler_params=pltpu.CompilerParams(
            # Both grid axes are fully independent -> megacore sharding on
            # v7x, harmless no-op on v5e/v6e.
            dimension_semantics=("parallel", "parallel"),
            vmem_limit_bytes=32 * 1024 * 1024,
        ),
        cost_estimate=cost,
    )(x3, w2, b2)

    # (B, C_out, H*W) -> (B, C_out, H, W): pure reshape, no transpose.
    return out.reshape(B, C_out, H, W)


if __name__ == "__main__":
    # Small shapes consistent with the module.
    B, C_in, H, W = 2, 4, 16, 16
    num_classes, num_anchors = 3, 3
    C_out = num_anchors * (num_classes + 5)  # 24

    key = jax.random.PRNGKey(0)
    kx, kw, kb = jax.random.split(key, 3)

    x = jax.random.normal(kx, (B, C_in, H, W), dtype=jnp.float32)
    # Deterministic, in-script parameter init (synthetic weights).
    weight = 0.1 * jax.random.normal(kw, (C_out, C_in, 1, 1), dtype=jnp.float32)
    bias = 0.01 * jax.random.normal(kb, (C_out,), dtype=jnp.float32)

    y = detect_forward(x, weight, bias)
    y = jax.block_until_ready(y)

    # Reference: plain-JAX 1x1 conv (channel matmul + bias), NCHW semantics.
    ref = jnp.einsum("bchw,oc->bohw", x, weight.reshape(C_out, C_in)) \
          + bias.reshape(1, C_out, 1, 1)

    assert y.shape == (B, C_out, H, W), y.shape
    assert jnp.allclose(y, ref, atol=1e-5, rtol=1e-5), \
        float(jnp.max(jnp.abs(y - ref)))

    print("KERNEL_OK")
</pallas_src>

<mosaic_0001>
module attributes {stable_mosaic.version = 11 : i64} {
  func.func @_conv1x1_kernel(%arg0: i32, %arg1: i32, %arg2: memref<1x4x256xf32, #tpu.memory_space<vmem>>, %arg3: memref<24x4xf32, #tpu.memory_space<vmem>>, %arg4: memref<24x1xf32, #tpu.memory_space<vmem>>, %arg5: memref<1x24x256xf32, #tpu.memory_space<vmem>>) attributes {dimension_semantics = [#tpu.dimension_semantics<parallel>, #tpu.dimension_semantics<parallel>], iteration_bounds = array<i64: 2, 1>, scalar_prefetch = 0 : i64, scratch_operands = 0 : i64, tpu.core_type = #tpu.core_type<tc>, window_params = [{transform_indices = @transform_0, window_bounds = array<i64: 1, 4, 256>}, {pipeline_mode = #tpu.pipeline_mode<synchronous>, transform_indices = @transform_1, window_bounds = array<i64: 24, 4>}, {pipeline_mode = #tpu.pipeline_mode<synchronous>, transform_indices = @transform_2, window_bounds = array<i64: 24, 1>}, {transform_indices = @transform_3, window_bounds = array<i64: 1, 24, 256>}]} {
    %c0 = arith.constant 0 : index
    %c0_0 = arith.constant 0 : index
    %c0_1 = arith.constant 0 : index
    %0 = vector.load %arg2[%c0, %c0_0, %c0_1] : memref<1x4x256xf32, #tpu.memory_space<vmem>>, vector<1x4x256xf32>
    %1 = vector.shape_cast %0 : vector<1x4x256xf32> to vector<4x256xf32>
    %c0_2 = arith.constant 0 : index
    %c0_3 = arith.constant 0 : index
    %2 = vector.load %arg3[%c0_2, %c0_3] : memref<24x4xf32, #tpu.memory_space<vmem>>, vector<24x4xf32>
    %3 = vector.extract_strided_slice %2 {offsets = [0, 0], sizes = [24, 1], strides = [1, 1]} : vector<24x4xf32> to vector<24x1xf32>
    %4 = vector.extract_strided_slice %1 {offsets = [0, 0], sizes = [1, 256], strides = [1, 1]} : vector<4x256xf32> to vector<1x256xf32>
    %5 = vector.broadcast %3 : vector<24x1xf32> to vector<24x256xf32>
    %6 = vector.broadcast %4 : vector<1x256xf32> to vector<24x256xf32>
    %7 = arith.mulf %5, %6 : vector<24x256xf32>
    %8 = vector.extract_strided_slice %2 {offsets = [0, 1], sizes = [24, 1], strides = [1, 1]} : vector<24x4xf32> to vector<24x1xf32>
    %9 = vector.extract_strided_slice %1 {offsets = [1, 0], sizes = [1, 256], strides = [1, 1]} : vector<4x256xf32> to vector<1x256xf32>
    %10 = vector.broadcast %8 : vector<24x1xf32> to vector<24x256xf32>
    %11 = vector.broadcast %9 : vector<1x256xf32> to vector<24x256xf32>
    %12 = arith.mulf %10, %11 : vector<24x256xf32>
    %13 = arith.addf %7, %12 : vector<24x256xf32>
    %14 = vector.extract_strided_slice %2 {offsets = [0, 2], sizes = [24, 1], strides = [1, 1]} : vector<24x4xf32> to vector<24x1xf32>
    %15 = vector.extract_strided_slice %1 {offsets = [2, 0], sizes = [1, 256], strides = [1, 1]} : vector<4x256xf32> to vector<1x256xf32>
    %16 = vector.broadcast %14 : vector<24x1xf32> to vector<24x256xf32>
    %17 = vector.broadcast %15 : vector<1x256xf32> to vector<24x256xf32>
    %18 = arith.mulf %16, %17 : vector<24x256xf32>
    %19 = arith.addf %13, %18 : vector<24x256xf32>
    %20 = vector.extract_strided_slice %2 {offsets = [0, 3], sizes = [24, 1], strides = [1, 1]} : vector<24x4xf32> to vector<24x1xf32>
    %21 = vector.extract_strided_slice %1 {offsets = [3, 0], sizes = [1, 256], strides = [1, 1]} : vector<4x256xf32> to vector<1x256xf32>
    %22 = vector.broadcast %20 : vector<24x1xf32> to vector<24x256xf32>
    %23 = vector.broadcast %21 : vector<1x256xf32> to vector<24x256xf32>
    %24 = arith.mulf %22, %23 : vector<24x256xf32>
    %25 = arith.addf %19, %24 : vector<24x256xf32>
    %c0_4 = arith.constant 0 : index
    %c0_5 = arith.constant 0 : index
    %26 = vector.load %arg4[%c0_4, %c0_5] : memref<24x1xf32, #tpu.memory_space<vmem>>, vector<24x1xf32>
    %27 = vector.broadcast %26 : vector<24x1xf32> to vector<24x256xf32>
    %28 = arith.addf %25, %27 : vector<24x256xf32>
    %c0_6 = arith.constant 0 : index
    %c0_7 = arith.constant 0 : index
    %c0_8 = arith.constant 0 : index
    %29 = vector.load %arg5[%c0_6, %c0_7, %c0_8] : memref<1x24x256xf32, #tpu.memory_space<vmem>>, vector<1x24x256xf32>
    %30 = vector.shape_cast %29 : vector<1x24x256xf32> to vector<24x256xf32>
    %31 = vector.shape_cast %28 : vector<24x256xf32> to vector<1x24x256xf32>
    tpu.vector_store %arg5[%c0_6, %c0_7, %c0_8], %31 {strides = array<i32>} : memref<1x24x256xf32, #tpu.memory_space<vmem>>, vector<1x24x256xf32>,
    return
  }
  func.func @transform_0(%arg0: i32, %arg1: i32) -> (i32, i32, i32) {
    %c0_i32 = arith.constant 0 : i32
    %c0_i32_0 = arith.constant 0 : i32
    return %arg0, %c0_i32, %arg1 : i32, i32, i32
  }
  func.func @transform_1(%arg0: i32, %arg1: i32) -> (i32, i32) {
    %c0_i32 = arith.constant 0 : i32
    %c0_i32_0 = arith.constant 0 : i32
    %c0_i32_1 = arith.constant 0 : i32
    return %c0_i32, %c0_i32_0 : i32, i32
  }
  func.func @transform_2(%arg0: i32, %arg1: i32) -> (i32, i32) {
    %c0_i32 = arith.constant 0 : i32
    %c0_i32_0 = arith.constant 0 : i32
    %c0_i32_1 = arith.constant 0 : i32
    return %c0_i32, %c0_i32_0 : i32, i32
  }
  func.func @transform_3(%arg0: i32, %arg1: i32) -> (i32, i32, i32) {
    %c0_i32 = arith.constant 0 : i32
    %c0_i32_0 = arith.constant 0 : i32
    return %arg0, %c0_i32, %arg1 : i32, i32, i32
  }
}

</mosaic_0001>

<llo_original>
// kernel: tpu_custom_call.1
$region0: #{tpu_custom_call.1}
  #allocation0 [shape = 'u32[]', space=smem, size = 0x4, offset = 0x4, fixed_abs, tag = 'smem constant byte address 0x4 - core index']
  #allocation1 [shape = 'u32[144,128]{1,0:T(1,128)}', space=vmem, size = 0x12000, scoped, tag = 'internal scratch']
  %s0 = inlined_call_operand.vmem [shape: f32[2,4,256], index: 0, kind: input, shape index: {}]
  %s1 = inlined_call_operand.vmem [shape: f32[24,4], index: 1, kind: input, shape index: {}]
  %s2 = inlined_call_operand.vmem [shape: f32[24,1], index: 2, kind: input, shape index: {}]
  %s3 = inlined_call_operand.hbm [shape: f32[2,24,256], index: 3, kind: output, shape index: {}]
  %s4 = sld [smem:[#allocation0]]
  $region45: #{tpu_custom_call.1} parent=0
    _
  %s6 = ssub.s32 1, %s4
  %s7 = scalar_select 0, %s6, %s4
  $region1: #{tpu_custom_call.1} parent=0
    #allocation2 [shape = 'u8[49152]{0}', space=vmem, size = 0xc000, scoped, tag = 'output window, operand 0']
    #allocation3 [shape = 's32[2]{0}', space=sflag, size = 0x8, scoped, tag = 'scoped memory for tpu_custom_call.1']
    %8 = vsyncpa [#allocation3], 0
    %s9 = scalar_lea.sflag [#allocation3], 1
    %10 = vsyncpa %s9, 0
    loop: start=0, step=1, limit=4
    $region2: #{tpu_custom_call.1} parent=1 // loop_pre_header
      _
    $region3: #{tpu_custom_call.1} parent=1 // loop_header
      %s12 = sphi 0, %s16
      %p13 = scmp.ge.s32.totalorder %s12, 4
      %s19 = sphi 0, %s31
      %s20 = sphi 0, %s27
      %s21 = sphi 0, %s19
      %s22 = sphi 0, %s20
      %s23 = sphi 0, %s21
      %s24 = sphi 0, %s22
      %s36 = sphi 0, %s38
      %s39 = sphi 0, %s36
      %s40 = sphi 0, %s39
      %s56 = sphi 0, %s40
      %s60 = sphi 0, %s60
      %s62 = sphi 0, %s60
      %s63 = sphi 0, %s62
      %s77 = sphi 0, %s63
      %s81 = sphi 0, %s81
      %s83 = sphi 0, %s81
      %s84 = sphi 0, %s83
      %s98 = sphi 0, %s84
      %s106 = sphi 0, %s108
      %s109 = sphi 0, %s106
      %s110 = sphi 0, %s109
      %s126 = sphi 0, %s110
    $region4: #{tpu_custom_call.1} parent=1 // loop_header_branch
      %15 = sbr.rel (%p13) target = $region8
    $region5: #{tpu_custom_call.1} parent=1 // loop_body
      %s17 = ssub.s32 %s12, 1
      %s18 = ssub.s32 %s12, 2
      %s25 = sadd.s32 1, %s20
      %p26 = scmp.ge.s32.totalorder %s25, 1
      %s27 = scalar_select %p26, 0, %s25
      %s28 = sadd.s32 1, %s19
      %s29 = scalar_select %p26, %s28, %s19
      %p30 = scmp.ge.s32.totalorder %s29, 2
      %s31 = scalar_select %p30, 0, %s29
      %s32 = ssub.s32 %s19, %s31
      %s33 = ssub.s32 %s20, %s27
      %s34 = sor.u32 %s32, %s33
      %p35 = scmp.eq.s32.totalorder %s34, 0
      %s37 = sadd.s32 %s36, 1
      %s38 = scalar_select %p35, %s36, %s37
      %p41 = pneg %p35
      %p42 = scmp.eq.s32.totalorder %s12, 1
      %p43 = por %p41, %p42
      %p44 = scmp.ne.s32.totalorder %s36, %s39
      %p45 = scmp.eq.s32.totalorder %s12, 0
      %p46 = por %p44, %p45
      %p47 = scmp.ne.s32.totalorder %s36, %s39
      %p48 = scmp.eq.s32.totalorder %s17, 1
      %p49 = por %p47, %p48
      %p50 = scmp.ne.s32.totalorder %s39, %s40
      %p51 = scmp.eq.s32.totalorder %s17, 0
      %p52 = por %p50, %p51
      %p53 = scmp.ne.s32.totalorder %s39, %s40
      %p54 = scmp.eq.s32.totalorder %s18, 1
      %p55 = por %p53, %p54
      %p57 = scmp.ne.s32.totalorder %s40, %s56
      %p58 = scmp.eq.s32.totalorder %s18, 0
      %p59 = por %p57, %p58
      %s61 = sadd.s32 %s60, 1
      %p64 = scmp.eq.s32.totalorder %s12, 1
      %p65 = scmp.ne.s32.totalorder %s60, %s62
      %p66 = scmp.eq.s32.totalorder %s12, 0
      %p67 = por %p65, %p66
      %p68 = scmp.ne.s32.totalorder %s60, %s62
      %p69 = scmp.eq.s32.totalorder %s17, 1
      %p70 = por %p68, %p69
      %p71 = scmp.ne.s32.totalorder %s62, %s63
      %p72 = scmp.eq.s32.totalorder %s17, 0
      %p73 = por %p71, %p72
      %p74 = scmp.ne.s32.totalorder %s62, %s63
      %p75 = scmp.eq.s32.totalorder %s18, 1
      %p76 = por %p74, %p75
      %p78 = scmp.ne.s32.totalorder %s63, %s77
      %p79 = scmp.eq.s32.totalorder %s18, 0
      %p80 = por %p78, %p79
      %s82 = sadd.s32 %s81, 1
      %p85 = scmp.eq.s32.totalorder %s12, 1
      %p86 = scmp.ne.s32.totalorder %s81, %s83
      %p87 = scmp.eq.s32.totalorder %s12, 0
      %p88 = por %p86, %p87
      %p89 = scmp.ne.s32.totalorder %s81, %s83
      %p90 = scmp.eq.s32.totalorder %s17, 1
      %p91 = por %p89, %p90
      %p92 = scmp.ne.s32.totalorder %s83, %s84
      %p93 = scmp.eq.s32.totalorder %s17, 0
      %p94 = por %p92, %p93
      %p95 = scmp.ne.s32.totalorder %s83, %s84
      %p96 = scmp.eq.s32.totalorder %s18, 1
      %p97 = por %p95, %p96
      %p99 = scmp.ne.s32.totalorder %s84, %s98
      %p100 = scmp.eq.s32.totalorder %s18, 0
      %p101 = por %p99, %p100
      %s102 = ssub.s32 %s19, %s31
      %s103 = ssub.s32 %s20, %s27
      %s104 = sor.u32 %s102, %s103
      %p105 = scmp.eq.s32.totalorder %s104, 0
      %s107 = sadd.s32 %s106, 1
      %s108 = scalar_select %p105, %s106, %s107
      %p111 = pneg %p105
      %p112 = scmp.eq.s32.totalorder %s12, 1
      %p113 = por %p111, %p112
      %p114 = scmp.ne.s32.totalorder %s106, %s109
      %p115 = scmp.eq.s32.totalorder %s12, 0
      %p116 = por %p114, %p115
      %p117 = scmp.ne.s32.totalorder %s106, %s109
      %p118 = scmp.eq.s32.totalorder %s17, 1
      %p119 = por %p117, %p118
      %p120 = scmp.ne.s32.totalorder %s109, %s110
      %p121 = scmp.eq.s32.totalorder %s17, 0
      %p122 = por %p120, %p121
      %p123 = scmp.ne.s32.totalorder %s109, %s110
      %p124 = scmp.eq.s32.totalorder %s18, 1
      %p125 = por %p123, %p124
      %p127 = scmp.ne.s32.totalorder %s110, %s126
      %p128 = scmp.eq.s32.totalorder %s18, 0
      %p129 = por %p127, %p128
      %p130 = scmp.le.s32.totalorder 1, %s12
      %p131 = scmp.lt.s32.totalorder %s12, 3
      %p132 = pnand %p130, %p131
      %p133 = pneg %p132
      // Predicated region
      $region9: #{tpu_custom_call.1} parent=5 // pred_check
        _
      $region10: #{tpu_custom_call.1} parent=5 // pred_check_branch
        %135 = sbr.rel (%p132) target = $region12
      $region11: #{tpu_custom_call.1} parent=5 // pred_region
        %s136 = ssub.s32 %s12, 1
        // Predicated region
        $region13: #{tpu_custom_call.1} parent=11 // pred_check
          %p137 = pneg %p73
        $region14: #{tpu_custom_call.1} parent=11 // pred_check_branch
          %139 = sbr.rel (%p137) target = $region16
        $region15: #{tpu_custom_call.1} parent=11 // pred_region
          _
        $region16: #{tpu_custom_call.1} parent=11 // pred_fallthru
          _
        // Predicated region
        $region17: #{tpu_custom_call.1} parent=11 // pred_check
          %p140 = pneg %p94
        $region18: #{tpu_custom_call.1} parent=11 // pred_check_branch
          %142 = sbr.rel (%p140) target = $region20
        $region19: #{tpu_custom_call.1} parent=11 // pred_region
          _
        $region20: #{tpu_custom_call.1} parent=11 // pred_fallthru
          _
      $region12: #{tpu_custom_call.1} parent=5 // pred_fallthru
        _
      %p143 = scmp.lt.s32.totalorder %s12, 2
      // Predicated region
      $region21: #{tpu_custom_call.1} parent=5 // pred_check
        %p144 = pneg %p143
      $region22: #{tpu_custom_call.1} parent=5 // pred_check_branch
        %146 = sbr.rel (%p144) target = $region24
      $region23: #{tpu_custom_call.1} parent=5 // pred_region
        // Predicated region
        $region25: #{tpu_custom_call.1} parent=23 // pred_check
          %p147 = pneg %p46
        $region26: #{tpu_custom_call.1} parent=23 // pred_check_branch
          %149 = sbr.rel (%p147) target = $region28
        $region27: #{tpu_custom_call.1} parent=23 // pred_region
          %s150 = smul.u32 2, %s20
          %p151 = scmp.lt.s32.totalorder %s19, 1
          %s152 = scalar_select %p151, %s19, 1
          %p153 = scmp.lt.s32.totalorder %s150, 1
          %s154 = scalar_select %p153, %s150, 1
          %s155 = smul.addr %s152, 2
          %s156 = sadd.s32 %s154, %s155
          %s157 = smul.addr %s156, 4
          %s158 = scalar_lea.vmem %s0, %s157
          %s159 = smul.u32 2, %s20
        $region28: #{tpu_custom_call.1} parent=23 // pred_fallthru
          _
      $region24: #{tpu_custom_call.1} parent=5 // pred_fallthru
        _
      %p160 = scmp.le.s32.totalorder 1, %s12
      %p161 = scmp.lt.s32.totalorder %s12, 3
      %p162 = pnand %p160, %p161
      %p163 = pneg %p162
      // Predicated region
      $region29: #{tpu_custom_call.1} parent=5 // pred_check
        _
      $region30: #{tpu_custom_call.1} parent=5 // pred_check_branch
        %165 = sbr.rel (%p162) target = $region32
      $region31: #{tpu_custom_call.1} parent=5 // pred_region
        %s166 = ssub.s32 %s12, 1
        %s167 = smul.u32 2, %s22
        %p168 = scmp.lt.s32.totalorder %s21, 1
        %s169 = scalar_select %p168, %s21, 1
        %p170 = scmp.lt.s32.totalorder %s167, 1
        %s171 = scalar_select %p170, %s167, 1
        %s172 = smul.addr %s169, 2
        %s173 = sadd.s32 %s171, %s172
        %s174 = smul.addr %s173, 4
        %s175 = scalar_lea.vmem %s0, %s174
        %p176 = pneg %p52
        %p177 = pneg %p49
        %p178 = pneg %p73
        %p179 = pneg %p70
        %p180 = pneg %p94
        %p181 = pneg %p91
        %p182 = pneg %p122
        %p183 = pneg %p119
        %s184 = sand.u32 %s109, 1
        %s185 = scalar_lea.sflag [#allocation3], %s184
        %s186 = sand.u32 %s109, 1
        %s187 = smul.addr %s186, 48
        %s188 = scalar_lea.vmem [#allocation2], %s187
        %s189 = smul.u32 2, %s22
        %p190 = scmp.lt.s32.totalorder %s21, 1
        %s191 = scalar_select %p190, %s21, 1
        %p192 = scmp.lt.s32.totalorder %s189, 1
        %s193 = scalar_select %p192, %s189, 1
        %s194 = smul.addr %s191, 2
        %s195 = sadd.s32 %s193, %s194
        %s196 = smul.addr %s195, 4
        %s197 = scalar_lea.vmem %s0, %s196
        %s198 = smul.u32 2, %s22
        %s199 = smul.u32 2, %s22
        %v200 = vld [vmem:[%s197] sm:$0xff]
        %v201 = vld [vmem:[%s1] sm:$0xff]
        %v202 = vld [vmem:[%s1 + $0x8] sm:$0xff]
        %v203 = vld [vmem:[%s1 + $0x10] sm:$0xff]
        %205 = vset.pattern.permute.xlu0 0
        %206 = vperm.xlu0 %205, %v201
        %v207 = vpop.permute.xlu0 %206
        %210 = vset.pattern.permute.xlu0 0
        %211 = vperm.xlu0 %210, %v202
        %v212 = vpop.permute.xlu0 %211
        %215 = vset.pattern.permute.xlu0 0
        %216 = vperm.xlu0 %215, %v203
        %v217 = vpop.permute.xlu0 %216
        %v220 = vlaneseq
        %v221 = vshrl.u32 %v220, 7
        %v222 = vsub.s32 0, %v221
        %v223 = vrot.slane %v200, %v222
        %v224 = vlaneseq
        %v225 = vshrl.u32 %v224, 7
        %v226 = vsub.s32 4, %v225
        %v227 = vrot.slane %v200, %v226
        %v230 = vlaneseq
        %v231 = vshrl.u32 %v230, 7
        %v232 = vsub.s32 0, %v231
        %v233 = vrot.slane %v223, %v232
        %v234 = vlaneseq
        %v235 = vshrl.u32 %v234, 7
        %v236 = vsub.s32 0, %v235
        %v237 = vrot.slane %v227, %v236
        %v238 = vmul.f32 %v207, %v233
        %v239 = vmul.f32 %v207, %v237
        %v240 = vmul.f32 %v212, %v233
        %v241 = vmul.f32 %v212, %v237
        %v242 = vmul.f32 %v217, %v233
        %v243 = vmul.f32 %v217, %v237
        %244 = vset.pattern.permute.xlu0 1
        %245 = vperm.xlu0 %244, %v201
        %v246 = vpop.permute.xlu0 %245
        %248 = vset.pattern.permute.xlu0 1
        %249 = vperm.xlu0 %248, %v202
        %v250 = vpop.permute.xlu0 %249
        %252 = vset.pattern.permute.xlu0 1
        %253 = vperm.xlu0 %252, %v203
        %v254 = vpop.permute.xlu0 %253
        %v256 = vlaneseq
        %v257 = vshrl.u32 %v256, 7
        %v258 = vsub.s32 1, %v257
        %v259 = vrot.slane %v200, %v258
        %v260 = vlaneseq
        %v261 = vshrl.u32 %v260, 7
        %v262 = vsub.s32 5, %v261
        %v263 = vrot.slane %v200, %v262
        %v266 = vlaneseq
        %v267 = vshrl.u32 %v266, 7
        %v268 = vsub.s32 1, %v267
        %v269 = vrot.slane %v259, %v268
        %v270 = vlaneseq
        %v271 = vshrl.u32 %v270, 7
        %v272 = vsub.s32 1, %v271
        %v273 = vrot.slane %v263, %v272
        %v274 = vmul.f32 %v246, %v269
        %v275 = vmul.f32 %v246, %v273
        %v276 = vmul.f32 %v250, %v269
        %v277 = vmul.f32 %v250, %v273
        %v278 = vmul.f32 %v254, %v269
        %v279 = vmul.f32 %v254, %v273
        %v280 = vadd.f32 %v238, %v274
        %v281 = vadd.f32 %v239, %v275
        %v282 = vadd.f32 %v240, %v276
        %v283 = vadd.f32 %v241, %v277
        %v284 = vadd.f32 %v242, %v278
        %v285 = vadd.f32 %v243, %v279
        %286 = vset.pattern.permute.xlu0 2
        %287 = vperm.xlu0 %286, %v201
        %v288 = vpop.permute.xlu0 %287
        %290 = vset.pattern.permute.xlu0 2
        %291 = vperm.xlu0 %290, %v202
        %v292 = vpop.permute.xlu0 %291
        %294 = vset.pattern.permute.xlu0 2
        %295 = vperm.xlu0 %294, %v203
        %v296 = vpop.permute.xlu0 %295
        %v298 = vlaneseq
        %v299 = vshrl.u32 %v298, 7
        %v300 = vsub.s32 2, %v299
        %v301 = vrot.slane %v200, %v300
        %v302 = vlaneseq
        %v303 = vshrl.u32 %v302, 7
        %v304 = vsub.s32 6, %v303
        %v305 = vrot.slane %v200, %v304
        %v308 = vlaneseq
        %v309 = vshrl.u32 %v308, 7
        %v310 = vsub.s32 2, %v309
        %v311 = vrot.slane %v301, %v310
        %v312 = vlaneseq
        %v313 = vshrl.u32 %v312, 7
        %v314 = vsub.s32 2, %v313
        %v315 = vrot.slane %v305, %v314
        %v316 = vmul.f32 %v288, %v311
        %v317 = vmul.f32 %v288, %v315
        %v318 = vmul.f32 %v292, %v311
        %v319 = vmul.f32 %v292, %v315
        %v320 = vmul.f32 %v296, %v311
        %v321 = vmul.f32 %v296, %v315
        %v322 = vadd.f32 %v280, %v316
        %v323 = vadd.f32 %v281, %v317
        %v324 = vadd.f32 %v282, %v318
        %v325 = vadd.f32 %v283, %v319
        %v326 = vadd.f32 %v284, %v320
        %v327 = vadd.f32 %v285, %v321
        %328 = vset.pattern.permute.xlu0 3
        %329 = vperm.xlu0 %328, %v201
        %v330 = vpop.permute.xlu0 %329
        %332 = vset.pattern.permute.xlu0 3
        %333 = vperm.xlu0 %332, %v202
        %v334 = vpop.permute.xlu0 %333
        %336 = vset.pattern.permute.xlu0 3
        %337 = vperm.xlu0 %336, %v203
        %v338 = vpop.permute.xlu0 %337
        %v340 = vlaneseq
        %v341 = vshrl.u32 %v340, 7
        %v342 = vsub.s32 3, %v341
        %v343 = vrot.slane %v200, %v342
        %v344 = vlaneseq
        %v345 = vshrl.u32 %v344, 7
        %v346 = vsub.s32 7, %v345
        %v347 = vrot.slane %v200, %v346
        %v350 = vlaneseq
        %v351 = vshrl.u32 %v350, 7
        %v352 = vsub.s32 3, %v351
        %v353 = vrot.slane %v343, %v352
        %v354 = vlaneseq
        %v355 = vshrl.u32 %v354, 7
        %v356 = vsub.s32 3, %v355
        %v357 = vrot.slane %v347, %v356
        %v358 = vmul.f32 %v330, %v353
        %v359 = vmul.f32 %v330, %v357
        %v360 = vmul.f32 %v334, %v353
        %v361 = vmul.f32 %v334, %v357
        %v362 = vmul.f32 %v338, %v353
        %v363 = vmul.f32 %v338, %v357
        %v364 = vadd.f32 %v322, %v358
        %v365 = vadd.f32 %v323, %v359
        %v366 = vadd.f32 %v324, %v360
        %v367 = vadd.f32 %v325, %v361
        %v368 = vadd.f32 %v326, %v362
        %v369 = vadd.f32 %v327, %v363
        %v370 = vld [vmem:[%s2] sm:$0xff]
        %v371 = vld [vmem:[%s2 + $0x8] sm:$0xff]
        %v372 = vld [vmem:[%s2 + $0x10] sm:$0xff]
        %374 = vset.pattern.permute.xlu0 0
        %375 = vperm.xlu0 %374, %v370
        %v376 = vpop.permute.xlu0 %375
        %379 = vset.pattern.permute.xlu0 0
        %380 = vperm.xlu0 %379, %v371
        %v381 = vpop.permute.xlu0 %380
        %384 = vset.pattern.permute.xlu0 0
        %385 = vperm.xlu0 %384, %v372
        %v386 = vpop.permute.xlu0 %385
        %v388 = vadd.f32 %v364, %v376
        %v389 = vadd.f32 %v365, %v376
        %v390 = vadd.f32 %v366, %v381
        %v391 = vadd.f32 %v367, %v381
        %v392 = vadd.f32 %v368, %v386
        %v393 = vadd.f32 %v369, %v386
        %394 = vst [vmem:[%s188] sm:$0xff] %v388
        %395 = vst [vmem:[%s188 + $0x8] sm:$0xff] %v389
        %396 = vst [vmem:[%s188 + $0x10] sm:$0xff] %v390
        %397 = vst [vmem:[%s188 + $0x18] sm:$0xff] %v391
        %398 = vst [vmem:[%s188 + $0x20] sm:$0xff] %v392
        %399 = vst [vmem:[%s188 + $0x28] sm:$0xff] %v393
        %s400 = sand.u32 %s109, 1
        %s401 = scalar_lea.sflag [#allocation3], %s400
        %s402 = sand.u32 %s109, 1
        %s403 = smul.addr %s402, 48
        %s404 = scalar_lea.vmem [#allocation2], %s403
        // Predicated region
        $region33: #{tpu_custom_call.1} parent=31 // pred_check
          %p405 = pneg %p119
        $region34: #{tpu_custom_call.1} parent=31 // pred_check_branch
          %407 = sbr.rel (%p405) target = $region36
        $region35: #{tpu_custom_call.1} parent=31 // pred_region
          %s408 = smul.u32 2, %s22
          %s410 = ssub.s32 768, 768
          %411 = vsyncadd %s401, %s410
          %s412 = smul.addr %s21, 6
          %s413 = sadd.s32 %s408, %s412
          %s414 = smul.addr %s413, 128
          %s415 = scalar_lea.hbm %s3, %s414
          %s416 = sshll.u32 %s404, 4
          %s417 = int_to_ptr.vmem [resolvable:$true] %s416
          %422 = dma.vmem_to_hbm [thread:$0]  %s417, 768, %s415, %s401, 256, 256, 16
        $region36: #{tpu_custom_call.1} parent=31 // pred_fallthru
          _
      $region32: #{tpu_custom_call.1} parent=5 // pred_fallthru
        _
      %p423 = scmp.le.s32.totalorder 2, %s12
      // Predicated region
      $region37: #{tpu_custom_call.1} parent=5 // pred_check
        %p424 = pneg %p423
      $region38: #{tpu_custom_call.1} parent=5 // pred_check_branch
        %426 = sbr.rel (%p424) target = $region40
      $region39: #{tpu_custom_call.1} parent=5 // pred_region
        %s427 = ssub.s32 %s12, 2
        // Predicated region
        $region41: #{tpu_custom_call.1} parent=39 // pred_check
          %p428 = pneg %p125
        $region42: #{tpu_custom_call.1} parent=39 // pred_check_branch
          %430 = sbr.rel (%p428) target = $region44
        $region43: #{tpu_custom_call.1} parent=39 // pred_region
          %s431 = sand.u32 %s110, 1
          %s432 = scalar_lea.sflag [#allocation3], %s431
          %s433 = sand.u32 %s110, 1
          %s434 = smul.addr %s433, 48
          %s435 = scalar_lea.vmem [#allocation2], %s434
          %436 = dma.done %s432, 768
        $region44: #{tpu_custom_call.1} parent=39 // pred_fallthru
          _
      $region40: #{tpu_custom_call.1} parent=5 // pred_fallthru
        _
    $region6: #{tpu_custom_call.1} parent=1 // loop_footer
      %s16 = sadd.s32 1, %s12
    $region7: #{tpu_custom_call.1} parent=1 // loop_footer_branch
      %11 = sbr.rel target = $region3
    $region8: #{tpu_custom_call.1} parent=1 // loop_exit
      _
    %437 = vsyncpa [#allocation3], 1
    %s438 = scalar_lea.sflag [#allocation3], 1
    %439 = vsyncpa %s438, 1

</llo_original>
